<compile_context>
chip_gen: v7x
topology: tpu7x:2x2x1
jax: 0.10.0
libtpu: 0.0.40
codegen_flags: <defaults>
</compile_context>

<pallas_src>
import jax
import jax.numpy as jnp
import numpy as np
from jax.experimental import pallas as pl
from jax.experimental.pallas import tpu as pltpu


def _round_up(x: int, m: int) -> int:
    return (x + m - 1) // m * m


def _tile(dim: int, pref: int, align: int) -> int:
    """Largest aligned tile <= pref that is legal for an array dim of `dim`."""
    if dim <= align:
        return dim                       # full-dim block (always legal)
    return max(align, min(pref, (dim // align) * align))


def _vmem_budget_bytes() -> int:
    """Per-generation VMEM budget with headroom for compiler scratch/sems."""
    cap = 64 << 20                       # conservative fallback (v7x physical)
    try:
        info = pltpu.get_tpu_info()
        cap = int(getattr(info, "vmem_capacity_bytes", cap))
    except Exception:
        pass
    return (cap * 25) // 32              # ~78%: ~100 MiB on 128 MiB, ~50 on 64


def _make_kernel(use_forget: bool, single_k: bool):
    if single_k:
        if use_forget:
            def kernel(logits_ref, hidden_ref, w_ref, bias_ref, mask_ref, o_ref):
                proj = jnp.dot(hidden_ref[...], w_ref[...],
                               preferred_element_type=jnp.float32)
                lg = logits_ref[...].astype(jnp.float32)
                # mask_ref already pre-scaled by -reduction_factor on host.
                out = lg + proj + bias_ref[...] + jnp.abs(lg) * mask_ref[...]
                o_ref[...] = out.astype(o_ref.dtype)
        else:
            def kernel(logits_ref, hidden_ref, w_ref, vec_ref, o_ref):
                proj = jnp.dot(hidden_ref[...], w_ref[...],
                               preferred_element_type=jnp.float32)
                # vec_ref = bias + token_adjustments (folded on host).
                out = logits_ref[...].astype(jnp.float32) + proj + vec_ref[...]
                o_ref[...] = out.astype(o_ref.dtype)
    else:
        # Multi-k: the f32 output block doubles as the accumulator. Its block
        # index ignores k, so it stays resident in VMEM across the reduction.
        if use_forget:
            def kernel(logits_ref, hidden_ref, w_ref, bias_ref, mask_ref, o_ref):
                @pl.when(pl.program_id(2) == 0)
                def _():
                    lg = logits_ref[...].astype(jnp.float32)
                    o_ref[...] = lg + bias_ref[...] + jnp.abs(lg) * mask_ref[...]
                o_ref[...] += jnp.dot(hidden_ref[...], w_ref[...],
                                      preferred_element_type=jnp.float32)
        else:
            def kernel(logits_ref, hidden_ref, w_ref, vec_ref, o_ref):
                @pl.when(pl.program_id(2) == 0)
                def _():
                    o_ref[...] = (logits_ref[...].astype(jnp.float32)
                                  + vec_ref[...])
                o_ref[...] += jnp.dot(hidden_ref[...], w_ref[...],
                                      preferred_element_type=jnp.float32)
    return kernel


def prepare_logit_adjuster_params(weight, bias, token_adjustments, forget_mask,
                                  *, reduction_factor: float, use_forget: bool,
                                  tk: int = 8192, matmul_dtype=jnp.bfloat16):
    """One-time parameter setup. Call once at module init, NOT per forward.

    Pre-casts the LM-head weight to the matmul dtype, pads it along H only if
    the reduction must be tiled (H > tk), and folds the per-vocab constants:
      * use_forget=False: add_vec = bias + token_adjustments (single stream)
      * use_forget=True : add_vec = bias, mul_vec = -reduction_factor * mask
    Doing this per call would be ~6*H*V bytes of extra HBM traffic.
    """
    H, V = weight.shape
    tk = _round_up(int(tk), 128)
    if H <= tk:
        single_k, tk_eff, H_pad = True, H, H
    else:
        single_k, tk_eff = False, tk
        H_pad = _round_up(H, tk_eff)

    w = weight.astype(matmul_dtype)
    if H_pad != H:
        w = jnp.pad(w, ((0, H_pad - H), (0, 0)))   # zero rows: no K pollution

    bias2d = bias.astype(jnp.float32).reshape(1, V)
    if use_forget:
        # NOTE: assumes forget_mask is a {0,1} mask over unique token indices
        # (matches the indexed .at[].set() in the PyTorch reference).
        add_vec = bias2d
        mul_vec = (-float(reduction_factor)
                   * forget_mask.astype(jnp.float32)).reshape(1, V)
    else:
        add_vec = bias2d + token_adjustments.astype(jnp.float32).reshape(1, V)
        mul_vec = None

    return dict(w=w, add_vec=add_vec, mul_vec=mul_vec, use_forget=use_forget,
                single_k=single_k, tk_eff=tk_eff, H=H, H_pad=H_pad, V=V,
                matmul_dtype=matmul_dtype)


def logit_adjuster_forward(logits, hidden_states, params, *,
                           tm: int = 256, tv: int = 1024):
    """Fused adjusted_logits = logits + adjustment + hidden @ W + bias."""
    # TODO(synk): the no-projection variant (hidden_size=None / hidden_states
    # is None) is not fused here; callers should skip the matmul term.
    # TODO(synk): logits could be donated via input_output_aliases once the
    # caller no longer needs the original buffer (saves an M x V allocation).
    squeeze_seq = logits.ndim == 2
    if squeeze_seq:
        logits = logits[:, None, :]
    if hidden_states.ndim == 2:
        hidden_states = hidden_states[:, None, :]

    B, S, V = logits.shape
    H = hidden_states.shape[-1]
    M = B * S
    assert V == params["V"] and H == params["H"]

    single_k = params["single_k"]
    tk_eff = params["tk_eff"]
    H_pad = params["H_pad"]
    use_forget = params["use_forget"]
    matmul_dtype = params["matmul_dtype"]

    # No host padding of logits/output: pl.cdiv grids + in-kernel boundary
    # masking handle M / V remainders.
    logits2d = logits.reshape(M, V)
    hidden2d = hidden_states.reshape(M, H).astype(matmul_dtype)
    if H_pad != H:      # only in the (rare) tiled-reduction path
        hidden2d = jnp.pad(hidden2d, ((0, 0), (0, H_pad - H)))

    out_dtype = logits.dtype
    if not single_k and out_dtype != jnp.float32:
        out_dtype = jnp.float32   # multi-k accumulates directly in the output

    lg_bytes = jnp.dtype(logits.dtype).itemsize
    mm_bytes = jnp.dtype(matmul_dtype).itemsize
    out_bytes = jnp.dtype(out_dtype).itemsize

    budget = _vmem_budget_bytes()
    tm_eff = _tile(M, tm, 8)
    tv_eff = _tile(V, tv, 128)

    def footprint(tm_, tv_):
        per = (tm_ * tv_ * lg_bytes          # logits block
               + tm_ * tk_eff * mm_bytes     # hidden rows
               + tk_eff * tv_ * mm_bytes     # weight panel
               + 2 * 8 * tv_ * 4             # bias / adjustment vectors
               + tm_ * tv_ * out_bytes)      # output block
        return 2 * per                       # double-buffered

    # Shrink tiles until the double-buffered footprint fits the VMEM budget.
    while footprint(tm_eff, tv_eff) > budget and tv_eff > 256:
        tv_eff = max(256, tv_eff // 2)
    while footprint(tm_eff, tv_eff) > budget and tm_eff > 64:
        tm_eff = max(64, tm_eff // 2)

    nv = pl.cdiv(V, tv_eff)
    nm = pl.cdiv(M, tm_eff)

    vmem_limit = int(min(max(int(1.3 * footprint(tm_eff, tv_eff)) + (2 << 20),
                             16 << 20), budget))

    kernel = _make_kernel(use_forget, single_k)
    vec_inputs = ([params["add_vec"], params["mul_vec"]] if use_forget
                  else [params["add_vec"]])
    n_vecs = len(vec_inputs)

    # Grid order: vocab tiles outer, row tiles inner -> each (H, tv) weight
    # panel is DMA'd from HBM once; only the smaller hidden rows re-stream.
    if single_k:
        grid = (nv, nm)
        in_specs = (
            [pl.BlockSpec((tm_eff, tv_eff), lambda j, i: (i, j)),    # logits
             pl.BlockSpec((tm_eff, tk_eff), lambda j, i: (i, 0)),    # hidden
             pl.BlockSpec((tk_eff, tv_eff), lambda j, i: (0, j))]    # weight
            + [pl.BlockSpec((1, tv_eff), lambda j, i: (0, j))] * n_vecs)
        out_specs = pl.BlockSpec((tm_eff, tv_eff), lambda j, i: (i, j))
        dim_sem = ("parallel", "parallel")
    else:
        nk = H_pad // tk_eff
        grid = (nv, nm, nk)
        in_specs = (
            [pl.BlockSpec((tm_eff, tv_eff), lambda j, i, k: (i, j)),
             pl.BlockSpec((tm_eff, tk_eff), lambda j, i, k: (i, k)),
             pl.BlockSpec((tk_eff, tv_eff), lambda j, i, k: (k, j))]
            + [pl.BlockSpec((1, tv_eff), lambda j, i, k: (0, j))] * n_vecs)
        out_specs = pl.BlockSpec((tm_eff, tv_eff), lambda j, i, k: (i, j))
        dim_sem = ("parallel", "parallel", "arbitrary")

    out2d = pl.pallas_call(
        kernel,
        out_shape=jax.ShapeDtypeStruct((M, V), out_dtype),
        grid_spec=pltpu.PrefetchScalarGridSpec(
            num_scalar_prefetch=0,
            grid=grid,
            in_specs=in_specs,
            out_specs=out_specs,
        ),
        compiler_params=pltpu.CompilerParams(
            dimension_semantics=dim_sem,
            vmem_limit_bytes=vmem_limit,
        ),
    )(logits2d, hidden2d, params["w"], *vec_inputs)

    out = out2d.reshape(B, S, V)
    if squeeze_seq:
        out = out[:, 0, :]
    return out


def reference_forward(logits, hidden_states, weight, bias, token_adjustments,
                      forget_tokens, reduction_factor, use_forget,
                      matmul_dtype=jnp.bfloat16):
    # Matches the kernel's bf16 matmul operands with f32 accumulation.
    h = hidden_states.astype(matmul_dtype)
    w = weight.astype(matmul_dtype)
    projected = jnp.einsum("bsh,hv->bsv", h, w,
                           preferred_element_type=jnp.float32) + bias
    if use_forget:
        adjustment = jnp.zeros_like(logits)
        adjustment = adjustment.at[:, :, forget_tokens].set(
            -reduction_factor * jnp.abs(logits[:, :, forget_tokens]))
    else:
        adjustment = jnp.broadcast_to(token_adjustments[None, None, :],
                                      logits.shape)
    return logits + adjustment + projected


def _run_case(key, B, S, H, V, reduction_factor, use_forget, *, tk=8192,
              tm=256, tv=1024):
    k_logits, k_hidden, k_w, k_b, k_adj = jax.random.split(key, 5)
    logits = jax.random.normal(k_logits, (B, S, V), dtype=jnp.float32)
    hidden_states = jax.random.normal(k_hidden, (B, S, H), dtype=jnp.float32)

    weight = 0.01 * jax.random.normal(k_w, (H, V), dtype=jnp.float32)
    bias = 0.05 * jax.random.normal(k_b, (V,), dtype=jnp.float32)
    token_adjustments = 0.1 * jax.random.normal(k_adj, (V,), dtype=jnp.float32)

    forget_tokens = jnp.array([3, 17, 42, 100, 200, V - 1], dtype=jnp.int32)
    forget_mask = jnp.zeros((V,), dtype=jnp.float32).at[forget_tokens].set(1.0)

    params = prepare_logit_adjuster_params(
        weight, bias, token_adjustments, forget_mask,
        reduction_factor=reduction_factor, use_forget=use_forget, tk=tk)

    out = logit_adjuster_forward(logits, hidden_states, params, tm=tm, tv=tv)
    jax.block_until_ready(out)

    ref = reference_forward(logits, hidden_states, weight, bias,
                            token_adjustments, forget_tokens,
                            reduction_factor, use_forget=use_forget)
    np.testing.assert_allclose(np.asarray(out), np.asarray(ref),
                               rtol=1e-5, atol=1e-5)


if __name__ == "__main__":
    key = jax.random.PRNGKey(0)
    k1, k2, k3, k4, k5 = jax.random.split(key, 5)

    # --- path 1: forget_tokens provided (mask-multiply formulation) ---
    _run_case(k1, B=2, S=8, H=32, V=256, reduction_factor=0.5, use_forget=True)

    # --- path 2: learned token_adjustments (forget_tokens is None) ---
    _run_case(k2, B=2, S=8, H=32, V=256, reduction_factor=0.5, use_forget=False)

    # --- path 3: non-divisible M and V (in-kernel boundary masking, no pad) ---
    _run_case(k3, B=3, S=5, H=32, V=300, reduction_factor=0.25, use_forget=True)

    # --- path 4: H-tiled reduction, accumulation directly in the f32 output ---
    _run_case(k4, B=2, S=8, H=256, V=256, reduction_factor=0.5,
              use_forget=True, tk=128)

    # --- path 5: H-tiled reduction with non-divisible H (H padded at setup) ---
    _run_case(k5, B=2, S=8, H=200, V=384, reduction_factor=0.5,
              use_forget=False, tk=128)

    print("KERNEL_OK")
</pallas_src>

<mosaic_0001>
module attributes {stable_mosaic.version = 11 : i64} {
  func.func @kernel(%arg0: i32, %arg1: i32, %arg2: memref<16x256xf32, #tpu.memory_space<vmem>>, %arg3: memref<16x32xbf16, #tpu.memory_space<vmem>>, %arg4: memref<32x256xbf16, #tpu.memory_space<vmem>>, %arg5: memref<1x256xf32, #tpu.memory_space<vmem>>, %arg6: memref<1x256xf32, #tpu.memory_space<vmem>>, %arg7: memref<16x256xf32, #tpu.memory_space<vmem>>) attributes {dimension_semantics = [#tpu.dimension_semantics<parallel>, #tpu.dimension_semantics<parallel>], iteration_bounds = array<i64: 1, 1>, scalar_prefetch = 0 : i64, scratch_operands = 0 : i64, tpu.core_type = #tpu.core_type<tc>, window_params = [{transform_indices = @transform_0, window_bounds = array<i64: 16, 256>}, {transform_indices = @transform_1, window_bounds = array<i64: 16, 32>}, {transform_indices = @transform_2, window_bounds = array<i64: 32, 256>}, {transform_indices = @transform_3, window_bounds = array<i64: 1, 256>}, {transform_indices = @transform_4, window_bounds = array<i64: 1, 256>}, {transform_indices = @transform_5, window_bounds = array<i64: 16, 256>}]} {
    %c0 = arith.constant 0 : index
    %c0_0 = arith.constant 0 : index
    %0 = vector.load %arg3[%c0, %c0_0] : memref<16x32xbf16, #tpu.memory_space<vmem>>, vector<16x32xbf16>
    %c0_1 = arith.constant 0 : index
    %c0_2 = arith.constant 0 : index
    %1 = vector.load %arg4[%c0_1, %c0_2] : memref<32x256xbf16, #tpu.memory_space<vmem>>, vector<32x256xbf16>
    %cst = arith.constant dense<0.000000e+00> : vector<16x256xf32>
    %2 = tpu.matmul %0, %1, %cst {dimension_numbers = #tpu.dot_dimension_numbers<[1], [0], [0], [1], [0, 0, 1, 1], [], []>} : vector<16x32xbf16>, vector<32x256xbf16>, vector<16x256xf32> -> vector<16x256xf32>
    %c0_3 = arith.constant 0 : index
    %c0_4 = arith.constant 0 : index
    %3 = vector.load %arg2[%c0_3, %c0_4] : memref<16x256xf32, #tpu.memory_space<vmem>>, vector<16x256xf32>
    %4 = arith.addf %3, %2 : vector<16x256xf32>
    %c0_5 = arith.constant 0 : index
    %c0_6 = arith.constant 0 : index
    %5 = vector.load %arg5[%c0_5, %c0_6] : memref<1x256xf32, #tpu.memory_space<vmem>>, vector<1x256xf32>
    %6 = vector.broadcast %5 : vector<1x256xf32> to vector<16x256xf32>
    %7 = arith.addf %4, %6 : vector<16x256xf32>
    %8 = math.absf %3 : vector<16x256xf32>
    %c0_7 = arith.constant 0 : index
    %c0_8 = arith.constant 0 : index
    %9 = vector.load %arg6[%c0_7, %c0_8] : memref<1x256xf32, #tpu.memory_space<vmem>>, vector<1x256xf32>
    %10 = vector.broadcast %9 : vector<1x256xf32> to vector<16x256xf32>
    %11 = arith.mulf %8, %10 : vector<16x256xf32>
    %12 = arith.addf %7, %11 : vector<16x256xf32>
    %c0_9 = arith.constant 0 : index
    %c0_10 = arith.constant 0 : index
    %13 = vector.load %arg7[%c0_9, %c0_10] : memref<16x256xf32, #tpu.memory_space<vmem>>, vector<16x256xf32>
    tpu.vector_store %arg7[%c0_9, %c0_10], %12 {strides = array<i32>} : memref<16x256xf32, #tpu.memory_space<vmem>>, vector<16x256xf32>,
    return
  }
  func.func @transform_0(%arg0: i32, %arg1: i32) -> (i32, i32) {
    %c0_i32 = arith.constant 0 : i32
    return %arg1, %arg0 : i32, i32
  }
  func.func @transform_1(%arg0: i32, %arg1: i32) -> (i32, i32) {
    %c0_i32 = arith.constant 0 : i32
    %c0_i32_0 = arith.constant 0 : i32
    return %arg1, %c0_i32 : i32, i32
  }
  func.func @transform_2(%arg0: i32, %arg1: i32) -> (i32, i32) {
    %c0_i32 = arith.constant 0 : i32
    %c0_i32_0 = arith.constant 0 : i32
    return %c0_i32, %arg0 : i32, i32
  }
  func.func @transform_3(%arg0: i32, %arg1: i32) -> (i32, i32) {
    %c0_i32 = arith.constant 0 : i32
    %c0_i32_0 = arith.constant 0 : i32
    return %c0_i32, %arg0 : i32, i32
  }
  func.func @transform_4(%arg0: i32, %arg1: i32) -> (i32, i32) {
    %c0_i32 = arith.constant 0 : i32
    %c0_i32_0 = arith.constant 0 : i32
    return %c0_i32, %arg0 : i32, i32
  }
  func.func @transform_5(%arg0: i32, %arg1: i32) -> (i32, i32) {
    %c0_i32 = arith.constant 0 : i32
    return %arg1, %arg0 : i32, i32
  }
}

</mosaic_0001>

<llo_original>
// kernel: tpu_custom_call.1
$region0: #{tpu_custom_call.1}
  #allocation0 [shape = 'u32[]', space=smem, size = 0x4, offset = 0x4, fixed_abs, tag = 'smem constant byte address 0x4 - core index']
  #allocation1 [shape = 'u32[144,128]{1,0:T(1,128)}', space=vmem, size = 0x12000, scoped, tag = 'internal scratch']
  %s0 = inlined_call_operand.hbm [shape: f32[16,256], index: 0, kind: input, shape index: {}]
  %s1 = inlined_call_operand.hbm [shape: bf16[16,32], index: 1, kind: input, shape index: {}]
  %s2 = inlined_call_operand.hbm [shape: bf16[32,256], index: 2, kind: input, shape index: {}]
  %s3 = inlined_call_operand.vmem [shape: f32[1,256], index: 3, kind: input, shape index: {}]
  %s4 = inlined_call_operand.vmem [shape: f32[1,256], index: 4, kind: input, shape index: {}]
  %s5 = inlined_call_operand.hbm [shape: f32[16,256], index: 5, kind: output, shape index: {}]
  %s6 = sld [smem:[#allocation0]]
  $region42: #{tpu_custom_call.1} parent=0
    _
  %s8 = ssub.s32 1, %s6
  %s9 = scalar_select 0, %s8, %s6
  $region1: #{tpu_custom_call.1} parent=0
    #allocation2 [shape = 'u8[16384]{0}', space=vmem, size = 0x4000, scoped, tag = 'input window, operand 0, single buffered']
    #allocation3 [shape = 's32[1]{0}', space=sflag, size = 0x4, scoped, tag = 'scoped memory for tpu_custom_call.1']
    #allocation4 [shape = 's32[1]{0}', space=sflag, size = 0x4, scoped, tag = 'scoped memory for tpu_custom_call.1']
    #allocation5 [shape = 'u8[4096]{0}', space=vmem, size = 0x1000, scoped, tag = 'input window, operand 1, single buffered']
    #allocation6 [shape = 's32[1]{0}', space=sflag, size = 0x4, scoped, tag = 'scoped memory for tpu_custom_call.1']
    #allocation7 [shape = 'u8[16384]{0}', space=vmem, size = 0x4000, scoped, tag = 'input window, operand 2, single buffered']
    #allocation8 [shape = 'u8[16384]{0}', space=vmem, size = 0x4000, scoped, tag = 'output window, operand 0, single buffered']
    %10 = vsyncpa [#allocation3], 0
    %11 = vsyncpa [#allocation6], 0
    %12 = vsyncpa [#allocation4], 0
    // Predicated region
    $region2: #{tpu_custom_call.1} parent=1 // pred_check
      _
    $region3: #{tpu_custom_call.1} parent=1 // pred_check_branch
      %14 = sbr.rel (0) target = $region5
    $region4: #{tpu_custom_call.1} parent=1 // pred_region
      %s16 = ssub.s32 512, 512
      %17 = vsyncadd [#allocation3], %s16
      %s18 = sshll.u32 [#allocation2], 4
      %s19 = int_to_ptr.vmem [resolvable:$true] %s18
      %24 = dma.hbm_to_vmem [thread:$0]  %s0, 512, %s19, [#allocation3], 256, 256, 16
    $region5: #{tpu_custom_call.1} parent=1 // pred_fallthru
      _
    // Predicated region
    $region6: #{tpu_custom_call.1} parent=1 // pred_check
      _
    $region7: #{tpu_custom_call.1} parent=1 // pred_check_branch
      %26 = sbr.rel (0) target = $region9
    $region8: #{tpu_custom_call.1} parent=1 // pred_region
      %s28 = ssub.s32 128, 128
      %29 = vsyncadd [#allocation6], %s28
      %s30 = sshll.u32 [#allocation5], 4
      %s31 = int_to_ptr.vmem [resolvable:$true] %s30
      %36 = dma.hbm_to_vmem [thread:$0]  %s1, 128, %s31, [#allocation6], 64, 64, 4
    $region9: #{tpu_custom_call.1} parent=1 // pred_fallthru
      _
    // Predicated region
    $region10: #{tpu_custom_call.1} parent=1 // pred_check
      _
    $region11: #{tpu_custom_call.1} parent=1 // pred_check_branch
      %38 = sbr.rel (0) target = $region13
    $region12: #{tpu_custom_call.1} parent=1 // pred_region
      %s40 = ssub.s32 512, 512
      %41 = vsyncadd [#allocation6], %s40
      %s42 = sshll.u32 [#allocation7], 4
      %s43 = int_to_ptr.vmem [resolvable:$true] %s42
      %48 = dma.hbm_to_vmem [thread:$0]  %s2, 512, %s43, [#allocation6], 128, 128, 8
    $region13: #{tpu_custom_call.1} parent=1 // pred_fallthru
      _
    // Predicated region
    $region14: #{tpu_custom_call.1} parent=1 // pred_check
      _
    $region15: #{tpu_custom_call.1} parent=1 // pred_check_branch
      %50 = sbr.rel (0) target = $region17
    $region16: #{tpu_custom_call.1} parent=1 // pred_region
      _
    $region17: #{tpu_custom_call.1} parent=1 // pred_fallthru
      _
    // Predicated region
    $region18: #{tpu_custom_call.1} parent=1 // pred_check
      _
    $region19: #{tpu_custom_call.1} parent=1 // pred_check_branch
      %52 = sbr.rel (0) target = $region21
    $region20: #{tpu_custom_call.1} parent=1 // pred_region
      _
    $region21: #{tpu_custom_call.1} parent=1 // pred_fallthru
      _
    // Predicated region
    $region22: #{tpu_custom_call.1} parent=1 // pred_check
      _
    $region23: #{tpu_custom_call.1} parent=1 // pred_check_branch
      %54 = sbr.rel (0) target = $region25
    $region24: #{tpu_custom_call.1} parent=1 // pred_region
      %55 = dma.done [#allocation3], 512
    $region25: #{tpu_custom_call.1} parent=1 // pred_fallthru
      _
    // Predicated region
    $region26: #{tpu_custom_call.1} parent=1 // pred_check
      _
    $region27: #{tpu_custom_call.1} parent=1 // pred_check_branch
      %57 = sbr.rel (0) target = $region29
    $region28: #{tpu_custom_call.1} parent=1 // pred_region
      %58 = dma.done [#allocation6], 128
    $region29: #{tpu_custom_call.1} parent=1 // pred_fallthru
      _
    // Predicated region
    $region30: #{tpu_custom_call.1} parent=1 // pred_check
      _
    $region31: #{tpu_custom_call.1} parent=1 // pred_check_branch
      %60 = sbr.rel (0) target = $region33
    $region32: #{tpu_custom_call.1} parent=1 // pred_region
      %61 = dma.done [#allocation6], 512
    $region33: #{tpu_custom_call.1} parent=1 // pred_fallthru
      _
    %v63 = vld [vmem:[#allocation5] sm:$0xf]
    %v64 = vld [vmem:[#allocation5 + $0x4] sm:$0xf]
    %v65 = vld [vmem:[#allocation7] sm:$0xff]
    %v66 = vld [vmem:[#allocation7 + $0x8] sm:$0xff]
    %v67 = vld [vmem:[#allocation7 + $0x10] sm:$0xff]
    %v68 = vld [vmem:[#allocation7 + $0x18] sm:$0xff]
    %v71 = vunpack.c.l.b16 %v63
    %v72 = vunpack.c.l.b16 %v64
    %v73 = vpack.c.b16 %v72, %v71
    %v78 = vunpack.c.l.b16 %v65
    %v79 = vunpack.c.h.b16 %v65
    %v80 = vunpack.c.l.b16 %v66
    %v81 = vunpack.c.h.b16 %v66
    %v82 = vunpack.c.l.b16 %v67
    %v83 = vunpack.c.h.b16 %v67
    %v84 = vunpack.c.l.b16 %v68
    %v85 = vunpack.c.h.b16 %v68
    %v86 = vpack.c.b16 %v80, %v78
    %v87 = vpack.c.b16 %v81, %v79
    %v88 = vpack.c.b16 %v84, %v82
    %v89 = vpack.c.b16 %v85, %v83
    %vm94 = vcmask 261120
    %v96 = vsel %vm94, %v73, 0
    %98 = vmatprep.subr.bf16.mxu0 %v87
    %99 = vmatpush1.bf16.msra.mxu0 %v86
    %100 = vmatprep.subr.bf16.mxu0 %v89
    %101 = vmatpush1.bf16.msra.mxu0 %v88
    %102 = vmatprep.subr.bf16.mxu0 0
    %103 = vmatpush1.bf16.msra.mxu0 0
    %104 = vmatprep.subr.bf16.mxu0 0
    %105 = vmatpush1.bf16.msra.mxu0 0
    %106 = vmatprep.subr.bf16.mxu0 0
    %107 = vmatpush1.bf16.msra.mxu0 0
    %108 = vmatprep.subr.bf16.mxu0 0
    %109 = vmatpush1.bf16.msra.mxu0 0
    %110 = vmatprep.subr.bf16.mxu0 0
    %111 = vmatpush1.bf16.msra.mxu0 0
    %112 = vmatprep.subr.bf16.mxu0 0
    %113 = vmatpush1.bf16.msra.mxu0 0
    %114 = vmatprep.subr.bf16.mxu0 0
    %115 = vmatpush1.bf16.msra.mxu0 0
    %116 = vmatprep.subr.bf16.mxu0 0
    %117 = vmatpush1.bf16.msra.mxu0 0
    %118 = vmatprep.subr.bf16.mxu0 0
    %119 = vmatpush1.bf16.msra.mxu0 0
    %120 = vmatprep.subr.bf16.mxu0 0
    %121 = vmatpush1.bf16.msra.mxu0 0
    %122 = vmatprep.subr.bf16.mxu0 0
    %123 = vmatpush1.bf16.msra.mxu0 0
    %124 = vmatprep.subr.bf16.mxu0 0
    %125 = vmatpush1.bf16.msra.mxu0 0
    %126 = vmatprep.subr.bf16.mxu0 0
    %127 = vmatpush1.bf16.msra.mxu0 0
    %128 = vmatprep.subr.bf16.mxu0 0
    %129 = vmatpush1.bf16.msra.mxu0 0
    %130 = vmatprep.mubr.bf16.mxu0 0
    %131 = vmatmul.mubr.bf16.gmra.mrb[0].mxu0 %v96
    %v132 = vpop.f32.mrb[0].mxu0
    %v133 = vadd.f32 0.0, %v132
    %v134 = vpop.f32.mrb[0].mxu0
    %v135 = vadd.f32 0.0, %v134
    %v136 = vpop.f32.mrb[0].mxu0
    %v137 = vadd.f32 0.0, %v136
    %v138 = vpop.f32.mrb[0].mxu0
    %v139 = vadd.f32 0.0, %v138
    %140 = vdwg.mxu0
    %v141 = vld [vmem:[#allocation2] sm:$0xff]
    %v142 = vld [vmem:[#allocation2 + $0x8] sm:$0xff]
    %v143 = vld [vmem:[#allocation2 + $0x10] sm:$0xff]
    %v144 = vld [vmem:[#allocation2 + $0x18] sm:$0xff]
    %v145 = vadd.f32 %v141, %v133
    %v146 = vadd.f32 %v142, %v135
    %v147 = vadd.f32 %v143, %v137
    %v148 = vadd.f32 %v144, %v139
    %v149 = vld [vmem:[%s3] sm:$0x3]
    %v151 = vlaneseq
    %v152 = vshrl.u32 %v151, 7
    %v153 = vsub.s32 0, %v152
    %v154 = vrot.slane %v149, %v153
    %v155 = vlaneseq
    %v156 = vshrl.u32 %v155, 7
    %v157 = vsub.s32 1, %v156
    %v158 = vrot.slane %v149, %v157
    %v161 = vadd.f32 %v145, %v154
    %v162 = vadd.f32 %v146, %v158
    %v163 = vadd.f32 %v147, %v154
    %v164 = vadd.f32 %v148, %v158
    %v165 = vand.u32 2147483647, %v141
    %v166 = vand.u32 2147483647, %v142
    %v167 = vand.u32 2147483647, %v143
    %v168 = vand.u32 2147483647, %v144
    %v169 = vld [vmem:[%s4] sm:$0x3]
    %v171 = vlaneseq
    %v172 = vshrl.u32 %v171, 7
    %v173 = vsub.s32 0, %v172
    %v174 = vrot.slane %v169, %v173
    %v175 = vlaneseq
    %v176 = vshrl.u32 %v175, 7
    %v177 = vsub.s32 1, %v176
    %v178 = vrot.slane %v169, %v177
    %v181 = vmul.f32 %v165, %v174
    %v182 = vmul.f32 %v166, %v178
    %v183 = vmul.f32 %v167, %v174
    %v184 = vmul.f32 %v168, %v178
    %v185 = vadd.f32 %v161, %v181
    %v186 = vadd.f32 %v162, %v182
    %v187 = vadd.f32 %v163, %v183
    %v188 = vadd.f32 %v164, %v184
    %189 = vst [vmem:[#allocation8] sm:$0xff] %v185
    %190 = vst [vmem:[#allocation8 + $0x8] sm:$0xff] %v186
    %191 = vst [vmem:[#allocation8 + $0x10] sm:$0xff] %v187
    %192 = vst [vmem:[#allocation8 + $0x18] sm:$0xff] %v188
    // Predicated region
    $region34: #{tpu_custom_call.1} parent=1 // pred_check
      _
    $region35: #{tpu_custom_call.1} parent=1 // pred_check_branch
      %194 = sbr.rel (0) target = $region37
    $region36: #{tpu_custom_call.1} parent=1 // pred_region
      %s196 = ssub.s32 512, 512
      %197 = vsyncadd [#allocation4], %s196
      %s198 = sshll.u32 [#allocation8], 4
      %s199 = int_to_ptr.vmem [resolvable:$true] %s198
      %204 = dma.vmem_to_hbm [thread:$0]  %s199, 512, %s5, [#allocation4], 256, 256, 16
    $region37: #{tpu_custom_call.1} parent=1 // pred_fallthru
      _
    // Predicated region
    $region38: #{tpu_custom_call.1} parent=1 // pred_check
      _
    $region39: #{tpu_custom_call.1} parent=1 // pred_check_branch
      %206 = sbr.rel (0) target = $region41
    $region40: #{tpu_custom_call.1} parent=1 // pred_region
      %207 = dma.done [#allocation4], 512
    $region41: #{tpu_custom_call.1} parent=1 // pred_fallthru
      _
    %208 = vsyncpa [#allocation3], 1
    %209 = vsyncpa [#allocation6], 1
    %210 = vsyncpa [#allocation4], 1

</llo_original>
